<compile_context>
chip_gen: v5e
topology: v5e:2x2
jax: 0.10.0
libtpu: 0.0.40
codegen_flags: <defaults>
</compile_context>

<pallas_src>
import functools
import math

import jax
import jax.numpy as jnp
from jax.experimental import pallas as pl
from jax.experimental.pallas import tpu as pltpu


def _round_up(x, m):
    return (x + m - 1) // m * m


@functools.lru_cache(maxsize=None)
def _vmem_capacity_bytes():
    try:
        return int(pltpu.get_tpu_info().vmem_capacity_bytes)
    except Exception:
        return 64 << 20  # conservative fallback: v7x per-TensorCore VMEM


def _dense_relu_kernel_single_k(x_ref, w_ref, b_ref, o_ref, *, compute_dtype):
    """Single K step: skip the accumulator scratch entirely."""
    x = x_ref[...].astype(compute_dtype)
    y = jnp.dot(x, w_ref[...], preferred_element_type=jnp.float32)
    y = y + b_ref[...].astype(jnp.float32)
    o_ref[...] = jnp.maximum(y, 0.0).astype(o_ref.dtype)


def _dense_relu_kernel_acc(x_ref, w_ref, b_ref, o_ref, acc_ref, *, compute_dtype):
    """Multi K step: f32 VMEM accumulator; bias + ReLU + downcast on last step."""
    k = pl.program_id(2)

    @pl.when(k == 0)
    def _():
        acc_ref[...] = jnp.zeros_like(acc_ref)

    x = x_ref[...].astype(compute_dtype)
    acc_ref[...] += jnp.dot(x, w_ref[...], preferred_element_type=jnp.float32)

    @pl.when(k == pl.num_programs(2) - 1)
    def _():
        y = acc_ref[...] + b_ref[...].astype(jnp.float32)
        o_ref[...] = jnp.maximum(y, 0.0).astype(o_ref.dtype)


def _select_tiles(M, N, K, x_bytes, w_bytes, out_bytes, vmem_budget):
    """Pick (tm, tn, tk) under a double-buffered VMEM footprint budget."""
    tm = min(1024, _round_up(M, 8))
    tn = min(512, _round_up(N, 128))
    tk = min(4096, _round_up(K, 128))

    def _need(tm_, tn_, tk_):
        return (2 * tm_ * tk_ * x_bytes        # double-buffered x tiles
                + 2 * tk_ * tn_ * w_bytes      # double-buffered weight tiles
                + 2 * tn_ * 4                  # bias (f32)
                + 2 * tm_ * tn_ * out_bytes    # output tile (double-buffered)
                + tm_ * tn_ * 4)               # f32 accumulator scratch

    while _need(tm, tn, tk) > vmem_budget:
        if tk > 512:
            tk = _round_up(tk // 2, 128)
        elif tm > 256:
            tm = _round_up(tm // 2, 8)
        elif tn > 256:
            tn = _round_up(tn // 2, 128)
        elif tk > 128:
            tk = _round_up(tk // 2, 128)
        elif tm > 8:
            tm = max(8, _round_up(tm // 2, 8))
        elif tn > 128:
            tn = _round_up(tn // 2, 128)
        else:
            break
    return tm, tn, tk, _need(tm, tn, tk)


@functools.partial(jax.jit, static_argnames=("mxu_dtype",))
def intermediate_forward(hidden_states, weight, bias, *, mxu_dtype=jnp.bfloat16):
    """hidden_states: (B, S, H); weight: (I, H) (PyTorch layout); bias: (I,).

    mxu_dtype selects the dtype fed to the MXU (accumulation is always f32):
      jnp.bfloat16 (default): ~3-6x MXU throughput + halved weight HBM bytes.
      jnp.float32           : bit-matches nn.Linear f32 numerics.
    """
    B, S, H = hidden_states.shape
    I = weight.shape[0]
    M, K, N = B * S, H, I

    compute_dtype = jnp.dtype(mxu_dtype)
    out_dtype = hidden_states.dtype

    # Capacity-aware tile selection.
    cap = _vmem_capacity_bytes()
    vmem_budget = int(0.55 * cap)
    x_bytes = hidden_states.dtype.itemsize          # x streamed in HBM dtype, cast in-kernel
    w_bytes = compute_dtype.itemsize                # weight stored (transposed) in MXU dtype
    out_bytes = jnp.dtype(out_dtype).itemsize
    tm, tn, tk, vmem_need = _select_tiles(M, N, K, x_bytes, w_bytes, out_bytes, vmem_budget)

    # Pad to tile multiples: M -> mult of tm (>=8), N/K -> mult of tn/tk (>=128).
    M_pad, N_pad, K_pad = _round_up(M, tm), _round_up(N, tn), _round_up(K, tk)

    x = hidden_states.reshape(M, K)
    if (M_pad, K_pad) != (M, K):
        x = jnp.pad(x, ((0, M_pad - M), (0, K_pad - K)))

    # One-time transpose + cast to MXU dtype: kernel consumes (K, N) directly,
    # standard (tm,tk)x(tk,tn) contraction -> no per-tile XLU transpose.
    w_t = weight.T.astype(compute_dtype)
    if (K_pad, N_pad) != (K, N):
        w_t = jnp.pad(w_t, ((0, K_pad - K), (0, N_pad - N)))

    b = bias
    if N_pad != N:
        b = jnp.pad(b, (0, N_pad - N))
    b = b.reshape(1, N_pad)

    grid_m, grid_n, grid_k = M_pad // tm, N_pad // tn, K_pad // tk

    # Megacore (v7x): make sure the outermost "parallel" axis has >= 2 blocks.
    n_outer = (grid_m == 1 and grid_n > 1)
    if n_outer:
        grid = (grid_n, grid_m, grid_k)
        x_map = lambda j, i, k: (i, k)
        w_map = lambda j, i, k: (k, j)
        b_map = lambda j, i, k: (0, j)
        o_map = lambda j, i, k: (i, j)
    else:
        grid = (grid_m, grid_n, grid_k)
        x_map = lambda i, j, k: (i, k)
        w_map = lambda i, j, k: (k, j)
        b_map = lambda i, j, k: (0, j)
        o_map = lambda i, j, k: (i, j)

    if grid_k > 1:
        kernel = functools.partial(_dense_relu_kernel_acc, compute_dtype=compute_dtype)
        scratch_shapes = [pltpu.VMEM((tm, tn), jnp.float32)]
    else:
        kernel = functools.partial(_dense_relu_kernel_single_k, compute_dtype=compute_dtype)
        scratch_shapes = []

    vmem_limit = int(min(max(int(1.3 * vmem_need), 32 << 20), int(0.9 * cap)))

    # Honest streamed-bytes estimate: x re-read per N block, weight per M block.
    cost = pl.CostEstimate(
        flops=2 * M_pad * N_pad * K_pad,
        transcendentals=0,
        bytes_accessed=int(
            grid_n * M_pad * K_pad * x_bytes
            + grid_m * K_pad * N_pad * w_bytes
            + grid_m * N_pad * 4
            + M_pad * N_pad * out_bytes),
    )

    out_padded = pl.pallas_call(
        kernel,
        out_shape=jax.ShapeDtypeStruct((M_pad, N_pad), out_dtype),
        grid_spec=pltpu.PrefetchScalarGridSpec(
            num_scalar_prefetch=0,
            grid=grid,
            in_specs=[
                pl.BlockSpec((tm, tk), x_map),   # x (M_pad, K_pad)
                pl.BlockSpec((tk, tn), w_map),   # weight^T (K_pad, N_pad)
                pl.BlockSpec((1, tn), b_map),    # bias (1, N_pad)
            ],
            out_specs=pl.BlockSpec((tm, tn), o_map),
            scratch_shapes=scratch_shapes,
        ),
        compiler_params=pltpu.CompilerParams(
            dimension_semantics=("parallel", "parallel", "arbitrary"),
            vmem_limit_bytes=vmem_limit,
        ),
        cost_estimate=cost,
    )(x, w_t, b)

    return out_padded[:M, :N].reshape(B, S, N)


if __name__ == "__main__":
    # Small shapes consistent with the module: batch=2, seq=8, hidden=32, intermediate=64.
    B, S, H, I = 2, 8, 32, 64

    key = jax.random.PRNGKey(0)
    kx, kw, kb = jax.random.split(key, 3)

    hidden_states = jax.random.normal(kx, (B, S, H), dtype=jnp.float32)
    # Deterministic "nn.Linear"-style params (synthetic, not a checkpoint load).
    bound = 1.0 / math.sqrt(H)
    weight = jax.random.uniform(kw, (I, H), minval=-bound, maxval=bound, dtype=jnp.float32)
    bias = jax.random.uniform(kb, (I,), minval=-bound, maxval=bound, dtype=jnp.float32)

    # Pure-JAX reference of the forward semantics.
    ref = jnp.maximum(jnp.einsum("bsh,ih->bsi", hidden_states, weight) + bias, 0.0)

    # Exact f32 path (matches nn.Linear numerics).
    out_f32 = jax.block_until_ready(
        intermediate_forward(hidden_states, weight, bias, mxu_dtype=jnp.float32))
    assert out_f32.shape == (B, S, I)
    assert jnp.allclose(out_f32, ref, atol=1e-5, rtol=1e-5)

    # Default fast path: bf16 MXU inputs, f32 accumulation.
    out_bf16 = jax.block_until_ready(intermediate_forward(hidden_states, weight, bias))
    assert out_bf16.shape == (B, S, I)
    assert jnp.allclose(out_bf16, ref, atol=2e-2, rtol=2e-2)

    print("KERNEL_OK")
</pallas_src>

<mosaic_0001>
module attributes {stable_mosaic.version = 11 : i64} {
  func.func @_dense_relu_kernel_single_k(%arg0: i32, %arg1: i32, %arg2: i32, %arg3: memref<16x128xf32, #tpu.memory_space<vmem>>, %arg4: memref<128x128xf32, #tpu.memory_space<vmem>>, %arg5: memref<1x128xf32, #tpu.memory_space<vmem>>, %arg6: memref<16x128xf32, #tpu.memory_space<vmem>>) attributes {dimension_semantics = [#tpu.dimension_semantics<parallel>, #tpu.dimension_semantics<parallel>, #tpu.dimension_semantics<arbitrary>], iteration_bounds = array<i64: 1, 1, 1>, scalar_prefetch = 0 : i64, scratch_operands = 0 : i64, tpu.core_type = #tpu.core_type<tc>, window_params = [{transform_indices = @transform_0, window_bounds = array<i64: 16, 128>}, {transform_indices = @transform_1, window_bounds = array<i64: 128, 128>}, {transform_indices = @transform_2, window_bounds = array<i64: 1, 128>}, {transform_indices = @transform_3, window_bounds = array<i64: 16, 128>}]} {
    %c0 = arith.constant 0 : index
    %c0_0 = arith.constant 0 : index
    %0 = vector.load %arg3[%c0, %c0_0] : memref<16x128xf32, #tpu.memory_space<vmem>>, vector<16x128xf32>
    %c0_1 = arith.constant 0 : index
    %c0_2 = arith.constant 0 : index
    %1 = vector.load %arg4[%c0_1, %c0_2] : memref<128x128xf32, #tpu.memory_space<vmem>>, vector<128x128xf32>
    %cst = arith.constant dense<0.000000e+00> : vector<16x128xf32>
    %2 = tpu.matmul %0, %1, %cst {dimension_numbers = #tpu.dot_dimension_numbers<[1], [0], [0], [1], [0, 0, 1, 1], [], []>} : vector<16x128xf32>, vector<128x128xf32>, vector<16x128xf32> -> vector<16x128xf32>
    %c0_3 = arith.constant 0 : index
    %c0_4 = arith.constant 0 : index
    %3 = vector.load %arg5[%c0_3, %c0_4] : memref<1x128xf32, #tpu.memory_space<vmem>>, vector<1x128xf32>
    %4 = vector.broadcast %3 : vector<1x128xf32> to vector<16x128xf32>
    %5 = arith.addf %2, %4 : vector<16x128xf32>
    %cst_5 = arith.constant 0.000000e+00 : f32
    %6 = vector.broadcast %cst_5 : f32 to vector<16x128xf32>
    %7 = arith.maximumf %5, %6 : vector<16x128xf32>
    %c0_6 = arith.constant 0 : index
    %c0_7 = arith.constant 0 : index
    %8 = vector.load %arg6[%c0_6, %c0_7] : memref<16x128xf32, #tpu.memory_space<vmem>>, vector<16x128xf32>
    tpu.vector_store %arg6[%c0_6, %c0_7], %7 {strides = array<i32>} : memref<16x128xf32, #tpu.memory_space<vmem>>, vector<16x128xf32>,
    return
  }
  func.func @transform_0(%arg0: i32, %arg1: i32, %arg2: i32) -> (i32, i32) {
    %c0_i32 = arith.constant 0 : i32
    return %arg0, %arg2 : i32, i32
  }
  func.func @transform_1(%arg0: i32, %arg1: i32, %arg2: i32) -> (i32, i32) {
    %c0_i32 = arith.constant 0 : i32
    return %arg2, %arg1 : i32, i32
  }
  func.func @transform_2(%arg0: i32, %arg1: i32, %arg2: i32) -> (i32, i32) {
    %c0_i32 = arith.constant 0 : i32
    %c0_i32_0 = arith.constant 0 : i32
    return %c0_i32, %arg1 : i32, i32
  }
  func.func @transform_3(%arg0: i32, %arg1: i32, %arg2: i32) -> (i32, i32) {
    %c0_i32 = arith.constant 0 : i32
    return %arg0, %arg1 : i32, i32
  }
}

</mosaic_0001>

<llo_original>
// kernel: intermediate_forward.1
$region0: #{intermediate_forward.1}
  #allocation0 [shape = 'u32[]', space=smem, size = 0x4, offset = 0x4, fixed_abs, tag = 'smem constant byte address 0x4 - core index']
  #allocation1 [shape = 'u32[72,128]{1,0:T(1,128)}', space=vmem, size = 0x9000, scoped, tag = 'internal scratch']
  %s0 = inlined_call_operand.vmem [shape: f32[16,128], index: 0, kind: input, shape index: {}]
  %s1 = inlined_call_operand.vmem [shape: f32[128,128], index: 1, kind: input, shape index: {}]
  %s2 = inlined_call_operand.vmem [shape: f32[1,128], index: 2, kind: input, shape index: {}]
  %s3 = inlined_call_operand.vmem [shape: f32[16,128], index: 3, kind: output, shape index: {}]
  %s4 = sld [smem:[#allocation0]]
  $region22: #{intermediate_forward.1} parent=0
    _
  %s6 = ssub.s32 1, %s4
  %s7 = scalar_select 0, %s6, %s4
  // Predicated region
  $region2: #{intermediate_forward.1} parent=0 // pred_check
    _
  $region3: #{intermediate_forward.1} parent=0 // pred_check_branch
    %9 = sbr.rel (0) target = $region5
  $region4: #{intermediate_forward.1} parent=0 // pred_region
    _
  $region5: #{intermediate_forward.1} parent=0 // pred_fallthru
    _
  // Predicated region
  $region6: #{intermediate_forward.1} parent=0 // pred_check
    _
  $region7: #{intermediate_forward.1} parent=0 // pred_check_branch
    %11 = sbr.rel (0) target = $region9
  $region8: #{intermediate_forward.1} parent=0 // pred_region
    _
  $region9: #{intermediate_forward.1} parent=0 // pred_fallthru
    _
  // Predicated region
  $region10: #{intermediate_forward.1} parent=0 // pred_check
    _
  $region11: #{intermediate_forward.1} parent=0 // pred_check_branch
    %13 = sbr.rel (0) target = $region13
  $region12: #{intermediate_forward.1} parent=0 // pred_region
    _
  $region13: #{intermediate_forward.1} parent=0 // pred_fallthru
    _
  %v14 = vld [vmem:[%s0] sm:$0xff]
  %v15 = vld [vmem:[%s0 + $0x8] sm:$0xff]
  %v16 = vld [vmem:[%s1] sm:$0xff]
  %v17 = vld [vmem:[%s1 + $0x8] sm:$0xff]
  %v18 = vld [vmem:[%s1 + $0x10] sm:$0xff]
  %v19 = vld [vmem:[%s1 + $0x18] sm:$0xff]
  %v20 = vld [vmem:[%s1 + $0x20] sm:$0xff]
  %v21 = vld [vmem:[%s1 + $0x28] sm:$0xff]
  %v22 = vld [vmem:[%s1 + $0x30] sm:$0xff]
  %v23 = vld [vmem:[%s1 + $0x38] sm:$0xff]
  %v24 = vld [vmem:[%s1 + $0x40] sm:$0xff]
  %v25 = vld [vmem:[%s1 + $0x48] sm:$0xff]
  %v26 = vld [vmem:[%s1 + $0x50] sm:$0xff]
  %v27 = vld [vmem:[%s1 + $0x58] sm:$0xff]
  %v28 = vld [vmem:[%s1 + $0x60] sm:$0xff]
  %v29 = vld [vmem:[%s1 + $0x68] sm:$0xff]
  %v30 = vld [vmem:[%s1 + $0x70] sm:$0xff]
  %v31 = vld [vmem:[%s1 + $0x78] sm:$0xff]
  %v32 = vld [vmem:[%s2] sm:$0x1]
  %v34 = vperm.slane %v32, 0
  %36 = vmatpush.msra.mxu0 %v31
  %37 = vmatpush.msra.mxu0 %v30
  %38 = vmatpush.msra.mxu0 %v29
  %39 = vmatpush.msra.mxu0 %v28
  %40 = vmatpush.msra.mxu0 %v27
  %41 = vmatpush.msra.mxu0 %v26
  %42 = vmatpush.msra.mxu0 %v25
  %43 = vmatpush.msra.mxu0 %v24
  %44 = vmatpush.msra.mxu0 %v23
  %45 = vmatpush.msra.mxu0 %v22
  %46 = vmatpush.msra.mxu0 %v21
  %47 = vmatpush.msra.mxu0 %v20
  %48 = vmatpush.msra.mxu0 %v19
  %49 = vmatpush.msra.mxu0 %v18
  %50 = vmatpush.msra.mxu0 %v17
  %51 = vmatpush.msra.mxu0 %v16
  %52 = vmatmul.f32.gmra.mxu0 %v14
  %v53 = vpop.f32.mrf.mxu0
  %v54 = vadd.f32 %v34, %v53
  %55 = vmatmul.f32.gmra.mxu0 %v15
  %v56 = vpop.f32.mrf.mxu0
  %v57 = vadd.f32 %v34, %v56
  %58 = vdwg.mxu0
  %v59 = vmax.f32 %v54, 0.0
  %v60 = vmax.f32 %v57, 0.0
  %61 = vst [vmem:[%s3] sm:$0xff] %v59
  %62 = vst [vmem:[%s3 + $0x8] sm:$0xff] %v60
  // Predicated region
  $region14: #{intermediate_forward.1} parent=0 // pred_check
    _
  $region15: #{intermediate_forward.1} parent=0 // pred_check_branch
    %64 = sbr.rel (0) target = $region17
  $region16: #{intermediate_forward.1} parent=0 // pred_region
    _
  $region17: #{intermediate_forward.1} parent=0 // pred_fallthru
    _
  // Predicated region
  $region18: #{intermediate_forward.1} parent=0 // pred_check
    _
  $region19: #{intermediate_forward.1} parent=0 // pred_check_branch
    %66 = sbr.rel (0) target = $region21
  $region20: #{intermediate_forward.1} parent=0 // pred_region
    _
  $region21: #{intermediate_forward.1} parent=0 // pred_fallthru
    _

</llo_original>
